<compile_context>
chip_gen: v6e
topology: v6e:2x2x1
jax: 0.10.0
libtpu: 0.0.40
codegen_flags: <defaults>
</compile_context>

<pallas_src>
import functools

import jax
import jax.numpy as jnp
from jax.experimental import pallas as pl
from jax.experimental.pallas import tpu as pltpu


def _round_up(n, m):
    return ((n + m - 1) // m) * m


def _device_kind():
    try:
        return jax.devices()[0].device_kind.lower()
    except Exception:
        return ""


def _default_residual_dtype():
    # v5e's VPU has no native bf16 ALUs: bf16 element-wise adds would lower to
    # unpack/compute/pack and cost more than the f32 spills they save.
    if "v5" in _device_kind():
        return jnp.float32
    return jnp.bfloat16


def _default_batch_tile(B):
    kind = _device_kind()
    # Dual-TensorCore chips (v7x): keep the grid a multiple of 2 so both TCs
    # get work.  Single-TC chips (v5e/v6e): full batch, grid=(1,), to avoid
    # per-grid-step pipeline overhead on a microsecond-scale kernel.
    if "7" in kind and B % 2 == 0 and (B // 2) % 8 == 0:
        return B // 2
    return B


# ----------------------------------------------------------------------------
# Kernel
# ----------------------------------------------------------------------------
def autoencoder_kernel(out_dims, res_dtype, x_ref,
                       w1, w2, w3, w4, w5, w6, w7, w8,
                       b_ref, out_ref):
    """Fused forward pass for one batch tile.

    Matmul inputs are bf16 (MXU-native), accumulation + bias add are f32,
    post-ReLU residuals are stored in `res_dtype` (bf16 on v6e/v7x, f32 on
    v5e).  `b_ref` packs the 8 biases as rows of a single [8, max_width] f32
    array.  `out_dims` are the static per-layer output widths (bottleneck
    zero-padded to a 128-lane multiple).
    """
    d1_, d2_, d3_, d4_, d5_, d6_, d7_, d8_ = out_dims

    def linear(h, w_ref, layer, out_dim):
        acc = jnp.dot(h.astype(jnp.bfloat16), w_ref[...],   # f32 MXU accumulate
                      preferred_element_type=jnp.float32)
        # Note: could use a stride-0 sublane-broadcast slice here; kept as the
        # simple [1, N] broadcast since the VPU has slack at these shapes.
        return acc + b_ref[layer:layer + 1, :out_dim]        # f32 bias add

    def relu_r(t):
        return jnp.maximum(t, 0.0).astype(res_dtype)

    x = x_ref[...]

    e1 = relu_r(linear(x, w1, 0, d1_))
    e2 = relu_r(linear(e1, w2, 1, d2_))
    e3 = relu_r(linear(e2, w3, 2, d3_))
    e4 = linear(e3, w4, 3, d4_)           # no ReLU on encoder4 (matches torch)

    u1 = relu_r(linear(e4, w5, 4, d5_))
    u2 = relu_r(linear(u1 + e3, w6, 5, d6_))
    u3 = relu_r(linear(u2 + e2, w7, 6, d7_))
    y = linear(u3 + e1, w8, 7, d8_)

    out_ref[...] = y.astype(out_ref.dtype)


# ----------------------------------------------------------------------------
# Parameters
# ----------------------------------------------------------------------------
def init_linear_params(key, fan_in, fan_out, dtype=jnp.float32):
    """PyTorch-style uniform(-1/sqrt(fan_in), 1/sqrt(fan_in)) init.

    Returns W with shape [fan_in, fan_out] (transposed vs. torch) and b [1, fan_out].
    """
    kw, kb = jax.random.split(key)
    bound = 1.0 / jnp.sqrt(jnp.asarray(fan_in, dtype=jnp.float32))
    w = jax.random.uniform(kw, (fan_in, fan_out), dtype, -bound, bound)
    b = jax.random.uniform(kb, (1, fan_out), dtype, -bound, bound)
    return w, b


def make_autoencoder_params(key, y_in, y1, y2, y3, y4):
    dims = [(y_in, y1), (y1, y2), (y2, y3), (y3, y4),   # encoder1..4
            (y4, y3), (y3, y2), (y2, y1), (y1, y_in)]   # decoder1..4
    keys = jax.random.split(key, len(dims))
    params = []
    for k, (fi, fo) in zip(keys, dims):
        params.extend(init_linear_params(k, fi, fo))
    return params  # flat list: w1, b1, w2, b2, ..., w8, b8


def prepare_params(params):
    """One-time preprocessing: pad the bottleneck, cast weights to bf16 and
    pack biases.  Call once; reuse the result across forward calls (this is
    the single biggest wall-clock lever at these shapes)."""
    (w1, b1, w2, b2, w3, b3, w4, b4,
     w5, b5, w6, b6, w7, b7, w8, b8) = params

    y_in = w1.shape[0]
    y1, y2, y3, y4 = w1.shape[1], w2.shape[1], w3.shape[1], w4.shape[1]

    # Pad the bottleneck width up to a full 128-lane multiple.  Exact: the new
    # columns of w4/b4 are zero (so padded e4 columns are zero) and the new
    # rows of w5 are zero, so decoder1 output is unchanged.
    y4p = max(_round_up(y4, 128), 128)
    if y4p != y4:
        w4 = jnp.pad(w4, ((0, 0), (0, y4p - y4)))
        b4 = jnp.pad(b4, ((0, 0), (0, y4p - y4)))
        w5 = jnp.pad(w5, ((0, y4p - y4), (0, 0)))

    out_dims = (y1, y2, y3, y4p, y3, y2, y1, y_in)
    max_w = max(out_dims)

    # Pack the 8 biases into one [8, max_w] f32 array (single resident buffer
    # instead of 8 tiny sublane-padded ones).
    b_pack = jnp.zeros((8, max_w), jnp.float32)
    for i, (b, d) in enumerate(zip((b1, b2, b3, b4, b5, b6, b7, b8), out_dims)):
        b_pack = b_pack.at[i, :d].set(b.reshape(-1).astype(jnp.float32))

    # Weights in bf16 (halves weight VMEM/DMA bytes; MXU-native inputs).
    weights = tuple(jnp.asarray(w, jnp.bfloat16)
                    for w in (w1, w2, w3, w4, w5, w6, w7, w8))
    b_pack = jax.block_until_ready(b_pack)
    weights = jax.block_until_ready(weights)

    return {"weights": weights, "b_pack": b_pack,
            "out_dims": out_dims, "y_in": y_in}


# ----------------------------------------------------------------------------
# Forward
# ----------------------------------------------------------------------------
def autoencoder_forward(x, prepared, *, batch_tile=None, residual_dtype=None):
    weights = prepared["weights"]
    b_pack = prepared["b_pack"]
    out_dims = prepared["out_dims"]
    y_in = prepared["y_in"]

    B, xf = x.shape
    assert xf == y_in, "input feature width mismatch"

    if batch_tile is None:
        batch_tile = _default_batch_tile(B)
    batch_tile = min(batch_tile, B)
    assert B % batch_tile == 0, "batch must be a multiple of batch_tile"
    grid = (B // batch_tile,)

    if residual_dtype is None:
        residual_dtype = _default_residual_dtype()

    # x / out: tiled over the batch.  Params: whole-array, single-buffered
    # VMEM residency (no per-grid-step double buffering / DMA bookkeeping).
    x_spec = pl.BlockSpec((batch_tile, y_in), lambda i: (i, 0))
    out_spec = pl.BlockSpec((batch_tile, y_in), lambda i: (i, 0))
    resident = pl.BlockSpec(memory_space=pltpu.MemorySpace.VMEM)

    flops = 2 * B * sum(w.shape[0] * w.shape[1] for w in weights)
    bytes_accessed = int(2 * B * y_in * x.dtype.itemsize           # x in + out
                         + sum(w.size * 2 for w in weights)        # bf16 weights
                         + b_pack.size * 4)

    kernel = functools.partial(autoencoder_kernel, out_dims, residual_dtype)

    return pl.pallas_call(
        kernel,
        out_shape=jax.ShapeDtypeStruct((B, y_in), x.dtype),
        grid=grid,
        in_specs=[x_spec] + [resident] * 8 + [resident],
        out_specs=out_spec,
        compiler_params=pltpu.CompilerParams(
            dimension_semantics=("parallel",),
            # Explicit limit: safe everywhere (v7x physical VMEM is only 64 MiB).
            vmem_limit_bytes=32 * 1024 * 1024,
        ),
        cost_estimate=pl.CostEstimate(
            flops=flops, transcendentals=0, bytes_accessed=bytes_accessed),
    )(x, *weights, b_pack)


# ----------------------------------------------------------------------------
# Pure-JAX reference (mirrors the kernel's bf16-matmul / f32-accumulate /
# residual-dtype math so a tight tolerance is valid).
# ----------------------------------------------------------------------------
def autoencoder_reference(x, params, res_dtype=jnp.bfloat16):
    (w1, b1, w2, b2, w3, b3, w4, b4,
     w5, b5, w6, b6, w7, b7, w8, b8) = params

    def lin(h, w, b):
        acc = jnp.dot(h.astype(jnp.bfloat16), w.astype(jnp.bfloat16),
                      preferred_element_type=jnp.float32)
        return acc + b.astype(jnp.float32)

    def relu_r(t):
        return jnp.maximum(t, 0.0).astype(res_dtype)

    e1 = relu_r(lin(x, w1, b1))
    e2 = relu_r(lin(e1, w2, b2))
    e3 = relu_r(lin(e2, w3, b3))
    e4 = lin(e3, w4, b4)
    d1 = relu_r(lin(e4, w5, b5))
    d2 = relu_r(lin(d1 + e3, w6, b6))
    d3 = relu_r(lin(d2 + e2, w7, b7))
    return lin(d3 + e1, w8, b8)


if __name__ == "__main__":
    # Small MLP sizes consistent with the module's forward ([B, y_in] activations).
    B, y_in, y1, y2, y3, y4 = 64, 128, 64, 64, 32, 16

    key = jax.random.PRNGKey(0)
    k_params, k_x = jax.random.split(key)

    params = make_autoencoder_params(k_params, y_in, y1, y2, y3, y4)
    x = jax.random.normal(k_x, (B, y_in), dtype=jnp.float32)

    # One-time parameter preparation (padding, bf16 cast, bias packing).
    prepared = prepare_params(params)
    res_dtype = _default_residual_dtype()

    out = autoencoder_forward(x, prepared, residual_dtype=res_dtype)
    out = jax.block_until_ready(out)

    ref = autoencoder_reference(x, params, res_dtype=res_dtype)
    assert out.shape == (B, y_in)
    assert jnp.allclose(out, ref, atol=1e-2, rtol=1e-2), "kernel mismatch vs reference"

    print("KERNEL_OK")
</pallas_src>

<mosaic_0001>
module attributes {stable_mosaic.version = 11 : i64} {
  func.func @autoencoder_kernel(%arg0: i32, %arg1: memref<64x128xf32, #tpu.memory_space<vmem>>, %arg2: memref<128x64xbf16, #tpu.memory_space<vmem>>, %arg3: memref<64x64xbf16, #tpu.memory_space<vmem>>, %arg4: memref<64x32xbf16, #tpu.memory_space<vmem>>, %arg5: memref<32x128xbf16, #tpu.memory_space<vmem>>, %arg6: memref<128x32xbf16, #tpu.memory_space<vmem>>, %arg7: memref<32x64xbf16, #tpu.memory_space<vmem>>, %arg8: memref<64x64xbf16, #tpu.memory_space<vmem>>, %arg9: memref<64x128xbf16, #tpu.memory_space<vmem>>, %arg10: memref<8x128xf32, #tpu.memory_space<vmem>>, %arg11: memref<64x128xf32, #tpu.memory_space<vmem>>) attributes {dimension_semantics = [#tpu.dimension_semantics<parallel>], iteration_bounds = array<i64: 1>, scalar_prefetch = 0 : i64, scratch_operands = 0 : i64, tpu.core_type = #tpu.core_type<tc>, window_params = [{transform_indices = @transform_0, window_bounds = array<i64: 64, 128>}, {pipeline_mode = #tpu.pipeline_mode<synchronous>, transform_indices = @transform_1, window_bounds = array<i64: 128, 64>}, {pipeline_mode = #tpu.pipeline_mode<synchronous>, transform_indices = @transform_2, window_bounds = array<i64: 64, 64>}, {pipeline_mode = #tpu.pipeline_mode<synchronous>, transform_indices = @transform_3, window_bounds = array<i64: 64, 32>}, {pipeline_mode = #tpu.pipeline_mode<synchronous>, transform_indices = @transform_4, window_bounds = array<i64: 32, 128>}, {pipeline_mode = #tpu.pipeline_mode<synchronous>, transform_indices = @transform_5, window_bounds = array<i64: 128, 32>}, {pipeline_mode = #tpu.pipeline_mode<synchronous>, transform_indices = @transform_6, window_bounds = array<i64: 32, 64>}, {pipeline_mode = #tpu.pipeline_mode<synchronous>, transform_indices = @transform_7, window_bounds = array<i64: 64, 64>}, {pipeline_mode = #tpu.pipeline_mode<synchronous>, transform_indices = @transform_8, window_bounds = array<i64: 64, 128>}, {pipeline_mode = #tpu.pipeline_mode<synchronous>, transform_indices = @transform_9, window_bounds = array<i64: 8, 128>}, {transform_indices = @transform_10, window_bounds = array<i64: 64, 128>}]} {
    %c0 = arith.constant 0 : index
    %c0_0 = arith.constant 0 : index
    %0 = vector.load %arg1[%c0, %c0_0] : memref<64x128xf32, #tpu.memory_space<vmem>>, vector<64x128xf32>
    %1 = arith.truncf %0 : vector<64x128xf32> to vector<64x128xbf16>
    %c0_1 = arith.constant 0 : index
    %c0_2 = arith.constant 0 : index
    %2 = vector.load %arg2[%c0_1, %c0_2] : memref<128x64xbf16, #tpu.memory_space<vmem>>, vector<128x64xbf16>
    %cst = arith.constant dense<0.000000e+00> : vector<64x64xf32>
    %3 = tpu.matmul %1, %2, %cst {dimension_numbers = #tpu.dot_dimension_numbers<[1], [0], [0], [1], [0, 0, 1, 1], [], []>} : vector<64x128xbf16>, vector<128x64xbf16>, vector<64x64xf32> -> vector<64x64xf32>
    %c0_3 = arith.constant 0 : index
    %c0_4 = arith.constant 0 : index
    %4 = vector.load %arg10[%c0_3, %c0_4] : memref<8x128xf32, #tpu.memory_space<vmem>>, vector<1x64xf32>
    %5 = vector.broadcast %4 : vector<1x64xf32> to vector<64x64xf32>
    %6 = arith.addf %3, %5 : vector<64x64xf32>
    %cst_5 = arith.constant 0.000000e+00 : f32
    %7 = vector.broadcast %cst_5 : f32 to vector<64x64xf32>
    %8 = arith.maximumf %6, %7 : vector<64x64xf32>
    %9 = arith.truncf %8 : vector<64x64xf32> to vector<64x64xbf16>
    %c0_6 = arith.constant 0 : index
    %c0_7 = arith.constant 0 : index
    %10 = vector.load %arg3[%c0_6, %c0_7] : memref<64x64xbf16, #tpu.memory_space<vmem>>, vector<64x64xbf16>
    %cst_8 = arith.constant dense<0.000000e+00> : vector<64x64xf32>
    %11 = tpu.matmul %9, %10, %cst_8 {dimension_numbers = #tpu.dot_dimension_numbers<[1], [0], [0], [1], [0, 0, 1, 1], [], []>} : vector<64x64xbf16>, vector<64x64xbf16>, vector<64x64xf32> -> vector<64x64xf32>
    %c1 = arith.constant 1 : index
    %c0_9 = arith.constant 0 : index
    %12 = vector.load %arg10[%c1, %c0_9] : memref<8x128xf32, #tpu.memory_space<vmem>>, vector<1x64xf32>
    %13 = vector.broadcast %12 : vector<1x64xf32> to vector<64x64xf32>
    %14 = arith.addf %11, %13 : vector<64x64xf32>
    %cst_10 = arith.constant 0.000000e+00 : f32
    %15 = vector.broadcast %cst_10 : f32 to vector<64x64xf32>
    %16 = arith.maximumf %14, %15 : vector<64x64xf32>
    %17 = arith.truncf %16 : vector<64x64xf32> to vector<64x64xbf16>
    %c0_11 = arith.constant 0 : index
    %c0_12 = arith.constant 0 : index
    %18 = vector.load %arg4[%c0_11, %c0_12] : memref<64x32xbf16, #tpu.memory_space<vmem>>, vector<64x32xbf16>
    %cst_13 = arith.constant dense<0.000000e+00> : vector<64x32xf32>
    %19 = tpu.matmul %17, %18, %cst_13 {dimension_numbers = #tpu.dot_dimension_numbers<[1], [0], [0], [1], [0, 0, 1, 1], [], []>} : vector<64x64xbf16>, vector<64x32xbf16>, vector<64x32xf32> -> vector<64x32xf32>
    %c2 = arith.constant 2 : index
    %c0_14 = arith.constant 0 : index
    %20 = vector.load %arg10[%c2, %c0_14] : memref<8x128xf32, #tpu.memory_space<vmem>>, vector<1x32xf32>
    %21 = vector.broadcast %20 : vector<1x32xf32> to vector<64x32xf32>
    %22 = arith.addf %19, %21 : vector<64x32xf32>
    %cst_15 = arith.constant 0.000000e+00 : f32
    %23 = vector.broadcast %cst_15 : f32 to vector<64x32xf32>
    %24 = arith.maximumf %22, %23 : vector<64x32xf32>
    %25 = arith.truncf %24 : vector<64x32xf32> to vector<64x32xbf16>
    %c0_16 = arith.constant 0 : index
    %c0_17 = arith.constant 0 : index
    %26 = vector.load %arg5[%c0_16, %c0_17] : memref<32x128xbf16, #tpu.memory_space<vmem>>, vector<32x128xbf16>
    %cst_18 = arith.constant dense<0.000000e+00> : vector<64x128xf32>
    %27 = tpu.matmul %25, %26, %cst_18 {dimension_numbers = #tpu.dot_dimension_numbers<[1], [0], [0], [1], [0, 0, 1, 1], [], []>} : vector<64x32xbf16>, vector<32x128xbf16>, vector<64x128xf32> -> vector<64x128xf32>
    %c3 = arith.constant 3 : index
    %c0_19 = arith.constant 0 : index
    %28 = vector.load %arg10[%c3, %c0_19] : memref<8x128xf32, #tpu.memory_space<vmem>>, vector<1x128xf32>
    %29 = vector.broadcast %28 : vector<1x128xf32> to vector<64x128xf32>
    %30 = arith.addf %27, %29 : vector<64x128xf32>
    %31 = arith.truncf %30 : vector<64x128xf32> to vector<64x128xbf16>
    %c0_20 = arith.constant 0 : index
    %c0_21 = arith.constant 0 : index
    %32 = vector.load %arg6[%c0_20, %c0_21] : memref<128x32xbf16, #tpu.memory_space<vmem>>, vector<128x32xbf16>
    %cst_22 = arith.constant dense<0.000000e+00> : vector<64x32xf32>
    %33 = tpu.matmul %31, %32, %cst_22 {dimension_numbers = #tpu.dot_dimension_numbers<[1], [0], [0], [1], [0, 0, 1, 1], [], []>} : vector<64x128xbf16>, vector<128x32xbf16>, vector<64x32xf32> -> vector<64x32xf32>
    %c4 = arith.constant 4 : index
    %c0_23 = arith.constant 0 : index
    %34 = vector.load %arg10[%c4, %c0_23] : memref<8x128xf32, #tpu.memory_space<vmem>>, vector<1x32xf32>
    %35 = vector.broadcast %34 : vector<1x32xf32> to vector<64x32xf32>
    %36 = arith.addf %33, %35 : vector<64x32xf32>
    %cst_24 = arith.constant 0.000000e+00 : f32
    %37 = vector.broadcast %cst_24 : f32 to vector<64x32xf32>
    %38 = arith.maximumf %36, %37 : vector<64x32xf32>
    %39 = arith.truncf %38 : vector<64x32xf32> to vector<64x32xbf16>
    %40 = arith.addf %39, %25 : vector<64x32xbf16>
    %c0_25 = arith.constant 0 : index
    %c0_26 = arith.constant 0 : index
    %41 = vector.load %arg7[%c0_25, %c0_26] : memref<32x64xbf16, #tpu.memory_space<vmem>>, vector<32x64xbf16>
    %cst_27 = arith.constant dense<0.000000e+00> : vector<64x64xf32>
    %42 = tpu.matmul %40, %41, %cst_27 {dimension_numbers = #tpu.dot_dimension_numbers<[1], [0], [0], [1], [0, 0, 1, 1], [], []>} : vector<64x32xbf16>, vector<32x64xbf16>, vector<64x64xf32> -> vector<64x64xf32>
    %c5 = arith.constant 5 : index
    %c0_28 = arith.constant 0 : index
    %43 = vector.load %arg10[%c5, %c0_28] : memref<8x128xf32, #tpu.memory_space<vmem>>, vector<1x64xf32>
    %44 = vector.broadcast %43 : vector<1x64xf32> to vector<64x64xf32>
    %45 = arith.addf %42, %44 : vector<64x64xf32>
    %cst_29 = arith.constant 0.000000e+00 : f32
    %46 = vector.broadcast %cst_29 : f32 to vector<64x64xf32>
    %47 = arith.maximumf %45, %46 : vector<64x64xf32>
    %48 = arith.truncf %47 : vector<64x64xf32> to vector<64x64xbf16>
    %49 = arith.addf %48, %17 : vector<64x64xbf16>
    %c0_30 = arith.constant 0 : index
    %c0_31 = arith.constant 0 : index
    %50 = vector.load %arg8[%c0_30, %c0_31] : memref<64x64xbf16, #tpu.memory_space<vmem>>, vector<64x64xbf16>
    %cst_32 = arith.constant dense<0.000000e+00> : vector<64x64xf32>
    %51 = tpu.matmul %49, %50, %cst_32 {dimension_numbers = #tpu.dot_dimension_numbers<[1], [0], [0], [1], [0, 0, 1, 1], [], []>} : vector<64x64xbf16>, vector<64x64xbf16>, vector<64x64xf32> -> vector<64x64xf32>
    %c6 = arith.constant 6 : index
    %c0_33 = arith.constant 0 : index
    %52 = vector.load %arg10[%c6, %c0_33] : memref<8x128xf32, #tpu.memory_space<vmem>>, vector<1x64xf32>
    %53 = vector.broadcast %52 : vector<1x64xf32> to vector<64x64xf32>
    %54 = arith.addf %51, %53 : vector<64x64xf32>
    %cst_34 = arith.constant 0.000000e+00 : f32
    %55 = vector.broadcast %cst_34 : f32 to vector<64x64xf32>
    %56 = arith.maximumf %54, %55 : vector<64x64xf32>
    %57 = arith.truncf %56 : vector<64x64xf32> to vector<64x64xbf16>
    %58 = arith.addf %57, %9 : vector<64x64xbf16>
    %c0_35 = arith.constant 0 : index
    %c0_36 = arith.constant 0 : index
    %59 = vector.load %arg9[%c0_35, %c0_36] : memref<64x128xbf16, #tpu.memory_space<vmem>>, vector<64x128xbf16>
    %cst_37 = arith.constant dense<0.000000e+00> : vector<64x128xf32>
    %60 = tpu.matmul %58, %59, %cst_37 {dimension_numbers = #tpu.dot_dimension_numbers<[1], [0], [0], [1], [0, 0, 1, 1], [], []>} : vector<64x64xbf16>, vector<64x128xbf16>, vector<64x128xf32> -> vector<64x128xf32>
    %c7 = arith.constant 7 : index
    %c0_38 = arith.constant 0 : index
    %61 = vector.load %arg10[%c7, %c0_38] : memref<8x128xf32, #tpu.memory_space<vmem>>, vector<1x128xf32>
    %62 = vector.broadcast %61 : vector<1x128xf32> to vector<64x128xf32>
    %63 = arith.addf %60, %62 : vector<64x128xf32>
    %c0_39 = arith.constant 0 : index
    %c0_40 = arith.constant 0 : index
    %64 = vector.load %arg11[%c0_39, %c0_40] : memref<64x128xf32, #tpu.memory_space<vmem>>, vector<64x128xf32>
    tpu.vector_store %arg11[%c0_39, %c0_40], %63 {strides = array<i32>} : memref<64x128xf32, #tpu.memory_space<vmem>>, vector<64x128xf32>,
    return
  }
  func.func @transform_0(%arg0: i32) -> (i32, i32) {
    %c0_i32 = arith.constant 0 : i32
    %c0_i32_0 = arith.constant 0 : i32
    return %arg0, %c0_i32 : i32, i32
  }
  func.func @transform_1(%arg0: i32) -> (i32, i32) {
    %c0_i32 = arith.constant 0 : i32
    %c0_i32_0 = arith.constant 0 : i32
    %c0_i32_1 = arith.constant 0 : i32
    return %c0_i32, %c0_i32_0 : i32, i32
  }
  func.func @transform_2(%arg0: i32) -> (i32, i32) {
    %c0_i32 = arith.constant 0 : i32
    %c0_i32_0 = arith.constant 0 : i32
    %c0_i32_1 = arith.constant 0 : i32
    return %c0_i32, %c0_i32_0 : i32, i32
  }
  func.func @transform_3(%arg0: i32) -> (i32, i32) {
    %c0_i32 = arith.constant 0 : i32
    %c0_i32_0 = arith.constant 0 : i32
    %c0_i32_1 = arith.constant 0 : i32
    return %c0_i32, %c0_i32_0 : i32, i32
  }
  func.func @transform_4(%arg0: i32) -> (i32, i32) {
    %c0_i32 = arith.constant 0 : i32
    %c0_i32_0 = arith.constant 0 : i32
    %c0_i32_1 = arith.constant 0 : i32
    return %c0_i32, %c0_i32_0 : i32, i32
  }
  func.func @transform_5(%arg0: i32) -> (i32, i32) {
    %c0_i32 = arith.constant 0 : i32
    %c0_i32_0 = arith.constant 0 : i32
    %c0_i32_1 = arith.constant 0 : i32
    return %c0_i32, %c0_i32_0 : i32, i32
  }
  func.func @transform_6(%arg0: i32) -> (i32, i32) {
    %c0_i32 = arith.constant 0 : i32
    %c0_i32_0 = arith.constant 0 : i32
    %c0_i32_1 = arith.constant 0 : i32
    return %c0_i32, %c0_i32_0 : i32, i32
  }
  func.func @transform_7(%arg0: i32) -> (i32, i32) {
    %c0_i32 = arith.constant 0 : i32
    %c0_i32_0 = arith.constant 0 : i32
    %c0_i32_1 = arith.constant 0 : i32
    return %c0_i32, %c0_i32_0 : i32, i32
  }
  func.func @transform_8(%arg0: i32) -> (i32, i32) {
    %c0_i32 = arith.constant 0 : i32
    %c0_i32_0 = arith.constant 0 : i32
    %c0_i32_1 = arith.constant 0 : i32
    return %c0_i32, %c0_i32_0 : i32, i32
  }
  func.func @transform_9(%arg0: i32) -> (i32, i32) {
    %c0_i32 = arith.constant 0 : i32
    %c0_i32_0 = arith.constant 0 : i32
    %c0_i32_1 = arith.constant 0 : i32
    return %c0_i32, %c0_i32_0 : i32, i32
  }
  func.func @transform_10(%arg0: i32) -> (i32, i32) {
    %c0_i32 = arith.constant 0 : i32
    %c0_i32_0 = arith.constant 0 : i32
    return %arg0, %c0_i32 : i32, i32
  }
}

</mosaic_0001>

<llo_original>
// kernel: tpu_custom_call.1
$region0: #{tpu_custom_call.1}
  #allocation0 [shape = 'u32[]', space=smem, size = 0x4, offset = 0x4, fixed_abs, tag = 'smem constant byte address 0x4 - core index']
  #allocation1 [shape = 'u32[144,128]{1,0:T(1,128)}', space=vmem, size = 0x12000, scoped, tag = 'internal scratch']
  %s0 = inlined_call_operand.vmem [shape: f32[64,128], index: 0, kind: input, shape index: {}]
  %s1 = inlined_call_operand.vmem [shape: bf16[128,64], index: 1, kind: input, shape index: {}]
  %s2 = inlined_call_operand.vmem [shape: bf16[64,64], index: 2, kind: input, shape index: {}]
  %s3 = inlined_call_operand.vmem [shape: bf16[64,32], index: 3, kind: input, shape index: {}]
  %s4 = inlined_call_operand.vmem [shape: bf16[32,128], index: 4, kind: input, shape index: {}]
  %s5 = inlined_call_operand.vmem [shape: bf16[128,32], index: 5, kind: input, shape index: {}]
  %s6 = inlined_call_operand.hbm [shape: bf16[32,64], index: 6, kind: input, shape index: {}]
  %s7 = inlined_call_operand.vmem [shape: bf16[64,64], index: 7, kind: input, shape index: {}]
  %s8 = inlined_call_operand.vmem [shape: bf16[64,128], index: 8, kind: input, shape index: {}]
  %s9 = inlined_call_operand.vmem [shape: f32[8,128], index: 9, kind: input, shape index: {}]
  %s10 = inlined_call_operand.hbm [shape: f32[64,128], index: 10, kind: output, shape index: {}]
  %s11 = sld [smem:[#allocation0]]
  $region54: #{tpu_custom_call.1} parent=0
    _
  %s13 = ssub.s32 1, %s11
  %s14 = scalar_select 0, %s13, %s11
  $region1: #{tpu_custom_call.1} parent=0
    #allocation2 [shape = 'u8[8192]{0}', space=vmem, size = 0x2000, scoped, tag = 'input window, operand 6, single buffered']
    #allocation3 [shape = 's32[1]{0}', space=sflag, size = 0x4, scoped, tag = 'scoped memory for tpu_custom_call.1']
    #allocation4 [shape = 's32[1]{0}', space=sflag, size = 0x4, scoped, tag = 'scoped memory for tpu_custom_call.1']
    #allocation5 [shape = 'u8[32768]{0}', space=vmem, size = 0x8000, scoped, tag = 'output window, operand 0, single buffered']
    %15 = vsyncpa [#allocation3], 0
    %16 = vsyncpa [#allocation4], 0
    // Predicated region
    $region2: #{tpu_custom_call.1} parent=1 // pred_check
      _
    $region3: #{tpu_custom_call.1} parent=1 // pred_check_branch
      %18 = sbr.rel (0) target = $region5
    $region4: #{tpu_custom_call.1} parent=1 // pred_region
      _
    $region5: #{tpu_custom_call.1} parent=1 // pred_fallthru
      _
    // Predicated region
    $region6: #{tpu_custom_call.1} parent=1 // pred_check
      _
    $region7: #{tpu_custom_call.1} parent=1 // pred_check_branch
      %20 = sbr.rel (0) target = $region9
    $region8: #{tpu_custom_call.1} parent=1 // pred_region
      _
    $region9: #{tpu_custom_call.1} parent=1 // pred_fallthru
      _
    // Predicated region
    $region10: #{tpu_custom_call.1} parent=1 // pred_check
      _
    $region11: #{tpu_custom_call.1} parent=1 // pred_check_branch
      %22 = sbr.rel (0) target = $region13
    $region12: #{tpu_custom_call.1} parent=1 // pred_region
      _
    $region13: #{tpu_custom_call.1} parent=1 // pred_fallthru
      _
    // Predicated region
    $region14: #{tpu_custom_call.1} parent=1 // pred_check
      _
    $region15: #{tpu_custom_call.1} parent=1 // pred_check_branch
      %24 = sbr.rel (0) target = $region17
    $region16: #{tpu_custom_call.1} parent=1 // pred_region
      _
    $region17: #{tpu_custom_call.1} parent=1 // pred_fallthru
      _
    // Predicated region
    $region18: #{tpu_custom_call.1} parent=1 // pred_check
      _
    $region19: #{tpu_custom_call.1} parent=1 // pred_check_branch
      %26 = sbr.rel (0) target = $region21
    $region20: #{tpu_custom_call.1} parent=1 // pred_region
      _
    $region21: #{tpu_custom_call.1} parent=1 // pred_fallthru
      _
    // Predicated region
    $region22: #{tpu_custom_call.1} parent=1 // pred_check
      _
    $region23: #{tpu_custom_call.1} parent=1 // pred_check_branch
      %28 = sbr.rel (0) target = $region25
    $region24: #{tpu_custom_call.1} parent=1 // pred_region
      _
    $region25: #{tpu_custom_call.1} parent=1 // pred_fallthru
      _
    // Predicated region
    $region26: #{tpu_custom_call.1} parent=1 // pred_check
      _
    $region27: #{tpu_custom_call.1} parent=1 // pred_check_branch
      %30 = sbr.rel (0) target = $region29
    $region28: #{tpu_custom_call.1} parent=1 // pred_region
      %s32 = ssub.s32 256, 256
      %33 = vsyncadd [#allocation3], %s32
      %s34 = sshll.u32 [#allocation2], 4
      %s35 = int_to_ptr.vmem [resolvable:$true] %s34
      %40 = dma.hbm_to_vmem [thread:$0]  %s6, 256, %s35, [#allocation3], 64, 64, 4
    $region29: #{tpu_custom_call.1} parent=1 // pred_fallthru
      _
    // Predicated region
    $region30: #{tpu_custom_call.1} parent=1 // pred_check
      _
    $region31: #{tpu_custom_call.1} parent=1 // pred_check_branch
      %42 = sbr.rel (0) target = $region33
    $region32: #{tpu_custom_call.1} parent=1 // pred_region
      _
    $region33: #{tpu_custom_call.1} parent=1 // pred_fallthru
      _
    // Predicated region
    $region34: #{tpu_custom_call.1} parent=1 // pred_check
      _
    $region35: #{tpu_custom_call.1} parent=1 // pred_check_branch
      %44 = sbr.rel (0) target = $region37
    $region36: #{tpu_custom_call.1} parent=1 // pred_region
      _
    $region37: #{tpu_custom_call.1} parent=1 // pred_fallthru
      _
    // Predicated region
    $region38: #{tpu_custom_call.1} parent=1 // pred_check
      _
    $region39: #{tpu_custom_call.1} parent=1 // pred_check_branch
      %46 = sbr.rel (0) target = $region41
    $region40: #{tpu_custom_call.1} parent=1 // pred_region
      _
    $region41: #{tpu_custom_call.1} parent=1 // pred_fallthru
      _
    // Predicated region
    $region42: #{tpu_custom_call.1} parent=1 // pred_check
      _
    $region43: #{tpu_custom_call.1} parent=1 // pred_check_branch
      %48 = sbr.rel (0) target = $region45
    $region44: #{tpu_custom_call.1} parent=1 // pred_region
      %49 = dma.done [#allocation3], 256
    $region45: #{tpu_custom_call.1} parent=1 // pred_fallthru
      _
    %v51 = vld [vmem:[%s0] sm:$0xff]
    %v52 = vld [vmem:[%s0 + $0x8] sm:$0xff]
    %v53 = vld [vmem:[%s0 + $0x10] sm:$0xff]
    %v54 = vld [vmem:[%s0 + $0x18] sm:$0xff]
    %v55 = vld [vmem:[%s0 + $0x20] sm:$0xff]
    %v56 = vld [vmem:[%s0 + $0x28] sm:$0xff]
    %v57 = vld [vmem:[%s0 + $0x30] sm:$0xff]
    %v58 = vld [vmem:[%s0 + $0x38] sm:$0xff]
    %v59 = vpack.c.bf16 %v52, %v51
    %v60 = vpack.c.bf16 %v54, %v53
    %v61 = vpack.c.bf16 %v56, %v55
    %v62 = vpack.c.bf16 %v58, %v57
    %v63 = vld [vmem:[%s1] sm:$0xf]
    %v64 = vld [vmem:[%s1 + $0x4] sm:$0xf]
    %v65 = vld [vmem:[%s1 + $0x8] sm:$0xf]
    %v66 = vld [vmem:[%s1 + $0xc] sm:$0xf]
    %v67 = vld [vmem:[%s1 + $0x10] sm:$0xf]
    %v68 = vld [vmem:[%s1 + $0x14] sm:$0xf]
    %v69 = vld [vmem:[%s1 + $0x18] sm:$0xf]
    %v70 = vld [vmem:[%s1 + $0x1c] sm:$0xf]
    %v71 = vld [vmem:[%s1 + $0x20] sm:$0xf]
    %v72 = vld [vmem:[%s1 + $0x24] sm:$0xf]
    %v73 = vld [vmem:[%s1 + $0x28] sm:$0xf]
    %v74 = vld [vmem:[%s1 + $0x2c] sm:$0xf]
    %v75 = vld [vmem:[%s1 + $0x30] sm:$0xf]
    %v76 = vld [vmem:[%s1 + $0x34] sm:$0xf]
    %v77 = vld [vmem:[%s1 + $0x38] sm:$0xf]
    %v78 = vld [vmem:[%s1 + $0x3c] sm:$0xf]
    %v79 = vld [vmem:[%s9] sm:$0x1]
    %v80 = vlaneseq
    %v81 = vshrl.u32 %v80, 7
    %v82 = vsub.s32 0, %v81
    %v83 = vrot.slane %v79, %v82
    %v100 = vunpack.c.l.b16 %v63
    %v101 = vunpack.c.l.b16 %v64
    %v102 = vunpack.c.l.b16 %v65
    %v103 = vunpack.c.l.b16 %v66
    %v104 = vunpack.c.l.b16 %v67
    %v105 = vunpack.c.l.b16 %v68
    %v106 = vunpack.c.l.b16 %v69
    %v107 = vunpack.c.l.b16 %v70
    %v108 = vunpack.c.l.b16 %v71
    %v109 = vunpack.c.l.b16 %v72
    %v110 = vunpack.c.l.b16 %v73
    %v111 = vunpack.c.l.b16 %v74
    %v112 = vunpack.c.l.b16 %v75
    %v113 = vunpack.c.l.b16 %v76
    %v114 = vunpack.c.l.b16 %v77
    %v115 = vunpack.c.l.b16 %v78
    %v116 = vpack.c.b16 %v101, %v100
    %v117 = vpack.c.b16 %v103, %v102
    %v118 = vpack.c.b16 %v105, %v104
    %v119 = vpack.c.b16 %v107, %v106
    %v120 = vpack.c.b16 %v109, %v108
    %v121 = vpack.c.b16 %v111, %v110
    %v122 = vpack.c.b16 %v113, %v112
    %v123 = vpack.c.b16 %v115, %v114
    %132 = vmatprep.subr.bf16.mxu0 0
    %133 = vmatpush1.bf16.msra.mxu0 %v123
    %134 = vmatprep.subr.bf16.mxu0 0
    %135 = vmatpush1.bf16.msra.mxu0 %v122
    %136 = vmatprep.subr.bf16.mxu0 0
    %137 = vmatpush1.bf16.msra.mxu0 %v121
    %138 = vmatprep.subr.bf16.mxu0 0
    %139 = vmatpush1.bf16.msra.mxu0 %v120
    %140 = vmatprep.subr.bf16.mxu0 0
    %141 = vmatpush1.bf16.msra.mxu0 %v119
    %142 = vmatprep.subr.bf16.mxu0 0
    %143 = vmatpush1.bf16.msra.mxu0 %v118
    %144 = vmatprep.subr.bf16.mxu0 0
    %145 = vmatpush1.bf16.msra.mxu0 %v117
    %146 = vmatprep.subr.bf16.mxu0 0
    %147 = vmatpush1.bf16.msra.mxu0 %v116
    %148 = vmatprep.subr.bf16.mxu0 0
    %149 = vmatpush2.bf16.msra.mxu0 0
    %150 = vmatprep.subr.bf16.mxu0 0
    %151 = vmatpush2.bf16.msra.mxu0 0
    %152 = vmatprep.subr.bf16.mxu0 0
    %153 = vmatpush2.bf16.msra.mxu0 0
    %154 = vmatprep.subr.bf16.mxu0 0
    %155 = vmatpush2.bf16.msra.mxu0 0
    %156 = vmatprep.subr.bf16.mxu0 0
    %157 = vmatpush2.bf16.msra.mxu0 0
    %158 = vmatprep.subr.bf16.mxu0 0
    %159 = vmatpush2.bf16.msra.mxu0 0
    %160 = vmatprep.subr.bf16.mxu0 0
    %161 = vmatpush2.bf16.msra.mxu0 0
    %162 = vmatprep.subr.bf16.mxu0 0
    %163 = vmatpush2.bf16.msra.mxu0 0
    %164 = vmatprep.mubr.bf16.mxu0 0
    %165 = vmatmul.mubr.bf16.gmra.mxu0 %v59
    %v166 = vpop.f32.mrf.mxu0
    %v167 = vadd.f32 %v83, %v166
    %v168 = vpop.f32.mrf.mxu0
    %v169 = vpop.f32.mrf.mxu0
    %v170 = vadd.f32 %v83, %v169
    %v171 = vpop.f32.mrf.mxu0
    %172 = vmatprep.mubr.bf16.mxu0 0
    %173 = vmatmul.mubr.bf16.gmra.mxu0 %v60
    %v174 = vpop.f32.mrf.mxu0
    %v175 = vadd.f32 %v83, %v174
    %v176 = vpop.f32.mrf.mxu0
    %v177 = vpop.f32.mrf.mxu0
    %v178 = vadd.f32 %v83, %v177
    %v179 = vpop.f32.mrf.mxu0
    %180 = vmatprep.mubr.bf16.mxu0 0
    %181 = vmatmul.mubr.bf16.gmra.mxu0 %v61
    %v182 = vpop.f32.mrf.mxu0
    %v183 = vadd.f32 %v83, %v182
    %v184 = vpop.f32.mrf.mxu0
    %v185 = vpop.f32.mrf.mxu0
    %v186 = vadd.f32 %v83, %v185
    %v187 = vpop.f32.mrf.mxu0
    %188 = vmatprep.mubr.bf16.mxu0 0
    %189 = vmatmul.mubr.bf16.gmra.mxu0 %v62
    %v190 = vpop.f32.mrf.mxu0
    %v191 = vadd.f32 %v83, %v190
    %v192 = vpop.f32.mrf.mxu0
    %v193 = vpop.f32.mrf.mxu0
    %v194 = vadd.f32 %v83, %v193
    %v195 = vpop.f32.mrf.mxu0
    %196 = vdwg.mxu0
    %v197 = vmax.f32 %v167, 0.0
    %v198 = vmax.f32 %v170, 0.0
    %v199 = vmax.f32 %v175, 0.0
    %v200 = vmax.f32 %v178, 0.0
    %v201 = vmax.f32 %v183, 0.0
    %v202 = vmax.f32 %v186, 0.0
    %v203 = vmax.f32 %v191, 0.0
    %v204 = vmax.f32 %v194, 0.0
    %v205 = vpack.c.bf16 %v198, %v197
    %v206 = vpack.c.bf16 %v200, %v199
    %v207 = vpack.c.bf16 %v202, %v201
    %v208 = vpack.c.bf16 %v204, %v203
    %v209 = vld [vmem:[%s2] sm:$0xf]
    %v210 = vld [vmem:[%s2 + $0x4] sm:$0xf]
    %v211 = vld [vmem:[%s2 + $0x8] sm:$0xf]
    %v212 = vld [vmem:[%s2 + $0xc] sm:$0xf]
    %v213 = vld [vmem:[%s2 + $0x10] sm:$0xf]
    %v214 = vld [vmem:[%s2 + $0x14] sm:$0xf]
    %v215 = vld [vmem:[%s2 + $0x18] sm:$0xf]
    %v216 = vld [vmem:[%s2 + $0x1c] sm:$0xf]
    %v217 = vld [vmem:[%s9 + $0x1] sm:$0x1]
    %v218 = vlaneseq
    %v219 = vshrl.u32 %v218, 7
    %v220 = vsub.s32 0, %v219
    %v221 = vrot.slane %v217, %v220
    %v230 = vunpack.c.l.b16 %v209
    %v231 = vunpack.c.l.b16 %v210
    %v232 = vunpack.c.l.b16 %v211
    %v233 = vunpack.c.l.b16 %v212
    %v234 = vunpack.c.l.b16 %v213
    %v235 = vunpack.c.l.b16 %v214
    %v236 = vunpack.c.l.b16 %v215
    %v237 = vunpack.c.l.b16 %v216
    %v238 = vpack.c.b16 %v231, %v230
    %v239 = vpack.c.b16 %v233, %v232
    %v240 = vpack.c.b16 %v235, %v234
    %v241 = vpack.c.b16 %v237, %v236
    %vm246 = vcmask 523264
    %v248 = vsel %vm246, %v205, 0
    %v251 = vsel %vm246, %v206, 0
    %v254 = vsel %vm246, %v207, 0
    %v257 = vsel %vm246, %v208, 0
    %259 = vmatprep.subr.bf16.mxu0 0
    %260 = vmatpush1.bf16.msra.mxu0 0
    %261 = vmatprep.subr.bf16.mxu0 0
    %262 = vmatpush1.bf16.msra.mxu0 0
    %263 = vmatprep.subr.bf16.mxu0 0
    %264 = vmatpush1.bf16.msra.mxu0 0
    %265 = vmatprep.subr.bf16.mxu0 0
    %266 = vmatpush1.bf16.msra.mxu0 0
    %267 = vmatprep.subr.bf16.mxu0 0
    %268 = vmatpush1.bf16.msra.mxu0 %v241
    %269 = vmatprep.subr.bf16.mxu0 0
    %270 = vmatpush1.bf16.msra.mxu0 %v240
    %271 = vmatprep.subr.bf16.mxu0 0
    %272 = vmatpush1.bf16.msra.mxu0 %v239
    %273 = vmatprep.subr.bf16.mxu0 0
    %274 = vmatpush1.bf16.msra.mxu0 %v238
    %275 = vmatprep.subr.bf16.mxu0 0
    %276 = vmatpush2.bf16.msra.mxu0 0
    %277 = vmatprep.subr.bf16.mxu0 0
    %278 = vmatpush2.bf16.msra.mxu0 0
    %279 = vmatprep.subr.bf16.mxu0 0
    %280 = vmatpush2.bf16.msra.mxu0 0
    %281 = vmatprep.subr.bf16.mxu0 0
    %282 = vmatpush2.bf16.msra.mxu0 0
    %283 = vmatprep.subr.bf16.mxu0 0
    %284 = vmatpush2.bf16.msra.mxu0 0
    %285 = vmatprep.subr.bf16.mxu0 0
    %286 = vmatpush2.bf16.msra.mxu0 0
    %287 = vmatprep.subr.bf16.mxu0 0
    %288 = vmatpush2.bf16.msra.mxu0 0
    %289 = vmatprep.subr.bf16.mxu0 0
    %290 = vmatpush2.bf16.msra.mxu0 0
    %291 = vmatprep.mubr.bf16.mxu0 0
    %292 = vmatmul.mubr.bf16.gmra.mxu0 %v248
    %v293 = vpop.f32.mrf.mxu0
    %v294 = vadd.f32 %v221, %v293
    %v295 = vpop.f32.mrf.mxu0
    %v296 = vpop.f32.mrf.mxu0
    %v297 = vadd.f32 %v221, %v296
    %v298 = vpop.f32.mrf.mxu0
    %299 = vmatprep.mubr.bf16.mxu0 0
    %300 = vmatmul.mubr.bf16.gmra.mxu0 %v251
    %v301 = vpop.f32.mrf.mxu0
    %v302 = vadd.f32 %v221, %v301
    %v303 = vpop.f32.mrf.mxu0
    %v304 = vpop.f32.mrf.mxu0
    %v305 = vadd.f32 %v221, %v304
    %v306 = vpop.f32.mrf.mxu0
    %307 = vmatprep.mubr.bf16.mxu0 0
    %308 = vmatmul.mubr.bf16.gmra.mxu0 %v254
    %v309 = vpop.f32.mrf.mxu0
    %v310 = vadd.f32 %v221, %v309
    %v311 = vpop.f32.mrf.mxu0
    %v312 = vpop.f32.mrf.mxu0
    %v313 = vadd.f32 %v221, %v312
    %v314 = vpop.f32.mrf.mxu0
    %315 = vmatprep.mubr.bf16.mxu0 0
    %316 = vmatmul.mubr.bf16.gmra.mxu0 %v257
    %v317 = vpop.f32.mrf.mxu0
    %v318 = vadd.f32 %v221, %v317
    %v319 = vpop.f32.mrf.mxu0
    %v320 = vpop.f32.mrf.mxu0
    %v321 = vadd.f32 %v221, %v320
    %v322 = vpop.f32.mrf.mxu0
    %323 = vdwg.mxu0
    %v324 = vmax.f32 %v294, 0.0
    %v325 = vmax.f32 %v297, 0.0
    %v326 = vmax.f32 %v302, 0.0
    %v327 = vmax.f32 %v305, 0.0
    %v328 = vmax.f32 %v310, 0.0
    %v329 = vmax.f32 %v313, 0.0
    %v330 = vmax.f32 %v318, 0.0
    %v331 = vmax.f32 %v321, 0.0
    %v332 = vpack.c.bf16 %v325, %v324
    %v333 = vpack.c.bf16 %v327, %v326
    %v334 = vpack.c.bf16 %v329, %v328
    %v335 = vpack.c.bf16 %v331, %v330
    %v336 = vld [vmem:[%s3] sm:$0xf]
    %v337 = vld [vmem:[%s3 + $0x4] sm:$0xf]
    %v338 = vld [vmem:[%s3 + $0x8] sm:$0xf]
    %v339 = vld [vmem:[%s3 + $0xc] sm:$0xf]
    %v340 = vld [vmem:[%s3 + $0x10] sm:$0xf]
    %v341 = vld [vmem:[%s3 + $0x14] sm:$0xf]
    %v342 = vld [vmem:[%s3 + $0x18] sm:$0xf]
    %v343 = vld [vmem:[%s3 + $0x1c] sm:$0xf]
    %v344 = vld [vmem:[%s9 + $0x2] sm:$0x1]
    %v345 = vlaneseq
    %v346 = vshrl.u32 %v345, 7
    %v347 = vsub.s32 0, %v346
    %v348 = vrot.slane %v344, %v347
    %v357 = vunpack.c.l.b16 %v336
    %v358 = vunpack.c.l.b16 %v337
    %v359 = vunpack.c.l.b16 %v338
    %v360 = vunpack.c.l.b16 %v339
    %v361 = vunpack.c.l.b16 %v340
    %v362 = vunpack.c.l.b16 %v341
    %v363 = vunpack.c.l.b16 %v342
    %v364 = vunpack.c.l.b16 %v343
    %v365 = vpack.c.b16 %v358, %v357
    %v366 = vpack.c.b16 %v360, %v359
    %v367 = vpack.c.b16 %v362, %v361
    %v368 = vpack.c.b16 %v364, %v363
    %v374 = vsel %vm246, %v332, 0
    %v377 = vsel %vm246, %v333, 0
    %v380 = vsel %vm246, %v334, 0
    %v383 = vsel %vm246, %v335, 0
    %385 = vmatprep.subr.bf16.mxu0 0
    %386 = vmatpush1.bf16.msra.mxu0 0
    %387 = vmatprep.subr.bf16.mxu0 0
    %388 = vmatpush1.bf16.msra.mxu0 0
    %389 = vmatprep.subr.bf16.mxu0 0
    %390 = vmatpush1.bf16.msra.mxu0 0
    %391 = vmatprep.subr.bf16.mxu0 0
    %392 = vmatpush1.bf16.msra.mxu0 0
    %393 = vmatprep.subr.bf16.mxu0 0
    %394 = vmatpush1.bf16.msra.mxu0 %v368
    %395 = vmatprep.subr.bf16.mxu0 0
    %396 = vmatpush1.bf16.msra.mxu0 %v367
    %397 = vmatprep.subr.bf16.mxu0 0
    %398 = vmatpush1.bf16.msra.mxu0 %v366
    %399 = vmatprep.subr.bf16.mxu0 0
    %400 = vmatpush1.bf16.msra.mxu0 %v365
    %401 = vmatprep.subr.bf16.mxu0 0
    %402 = vmatpush2.bf16.msra.mxu0 0
    %403 = vmatprep.subr.bf16.mxu0 0
    %404 = vmatpush2.bf16.msra.mxu0 0
    %405 = vmatprep.subr.bf16.mxu0 0
    %406 = vmatpush2.bf16.msra.mxu0 0
    %407 = vmatprep.subr.bf16.mxu0 0
    %408 = vmatpush2.bf16.msra.mxu0 0
    %409 = vmatprep.subr.bf16.mxu0 0
    %410 = vmatpush2.bf16.msra.mxu0 0
    %411 = vmatprep.subr.bf16.mxu0 0
    %412 = vmatpush2.bf16.msra.mxu0 0
    %413 = vmatprep.subr.bf16.mxu0 0
    %414 = vmatpush2.bf16.msra.mxu0 0
    %415 = vmatprep.subr.bf16.mxu0 0
    %416 = vmatpush2.bf16.msra.mxu0 0
    %417 = vmatprep.mubr.bf16.mxu0 0
    %418 = vmatmul.mubr.bf16.gmra.mxu0 %v374
    %v419 = vpop.f32.mrf.mxu0
    %v420 = vadd.f32 %v348, %v419
    %v421 = vpop.f32.mrf.mxu0
    %v422 = vpop.f32.mrf.mxu0
    %v423 = vadd.f32 %v348, %v422
    %v424 = vpop.f32.mrf.mxu0
    %425 = vmatprep.mubr.bf16.mxu0 0
    %426 = vmatmul.mubr.bf16.gmra.mxu0 %v377
    %v427 = vpop.f32.mrf.mxu0
    %v428 = vadd.f32 %v348, %v427
    %v429 = vpop.f32.mrf.mxu0
    %v430 = vpop.f32.mrf.mxu0
    %v431 = vadd.f32 %v348, %v430
    %v432 = vpop.f32.mrf.mxu0
    %433 = vmatprep.mubr.bf16.mxu0 0
    %434 = vmatmul.mubr.bf16.gmra.mxu0 %v380
    %v435 = vpop.f32.mrf.mxu0
    %v436 = vadd.f32 %v348, %v435
    %v437 = vpop.f32.mrf.mxu0
    %v438 = vpop.f32.mrf.mxu0
    %v439 = vadd.f32 %v348, %v438
    %v440 = vpop.f32.mrf.mxu0
    %441 = vmatprep.mubr.bf16.mxu0 0
    %442 = vmatmul.mubr.bf16.gmra.mxu0 %v383
    %v443 = vpop.f32.mrf.mxu0
    %v444 = vadd.f32 %v348, %v443
    %v445 = vpop.f32.mrf.mxu0
    %v446 = vpop.f32.mrf.mxu0
    %v447 = vadd.f32 %v348, %v446
    %v448 = vpop.f32.mrf.mxu0
    %449 = vdwg.mxu0
    %v450 = vmax.f32 %v420, 0.0
    %v451 = vmax.f32 %v423, 0.0
    %v452 = vmax.f32 %v428, 0.0
    %v453 = vmax.f32 %v431, 0.0
    %v454 = vmax.f32 %v436, 0.0
    %v455 = vmax.f32 %v439, 0.0
    %v456 = vmax.f32 %v444, 0.0
    %v457 = vmax.f32 %v447, 0.0
    %v458 = vpack.c.bf16 %v451, %v450
    %v459 = vpack.c.bf16 %v453, %v452
    %v460 = vpack.c.bf16 %v455, %v454
    %v461 = vpack.c.bf16 %v457, %v456
    %v462 = vld [vmem:[%s4] sm:$0xf]
    %v463 = vld [vmem:[%s4 + $0x4] sm:$0xf]
    %v464 = vld [vmem:[%s4 + $0x8] sm:$0xf]
    %v465 = vld [vmem:[%s4 + $0xc] sm:$0xf]
    %v466 = vld [vmem:[%s9 + $0x3] sm:$0x1]
    %v467 = vlaneseq
    %v468 = vshrl.u32 %v467, 7
    %v469 = vsub.s32 0, %v468
    %v470 = vrot.slane %v466, %v469
    %v475 = vunpack.c.l.b16 %v462
    %v476 = vunpack.c.l.b16 %v463
    %v477 = vunpack.c.l.b16 %v464
    %v478 = vunpack.c.l.b16 %v465
    %v479 = vpack.c.b16 %v476, %v475
    %v480 = vpack.c.b16 %v478, %v477
    %vm483 = vcmask 261120
    %v485 = vsel %vm483, %v458, 0
    %v488 = vsel %vm483, %v459, 0
    %v491 = vsel %vm483, %v460, 0
    %v494 = vsel %vm483, %v461, 0
    %496 = vmatprep.subr.bf16.mxu0 0
    %497 = vmatpush1.bf16.msra.mxu0 0
    %498 = vmatprep.subr.bf16.mxu0 0
    %499 = vmatpush1.bf16.msra.mxu0 0
    %500 = vmatprep.subr.bf16.mxu0 0
    %501 = vmatpush1.bf16.msra.mxu0 0
    %502 = vmatprep.subr.bf16.mxu0 0
    %503 = vmatpush1.bf16.msra.mxu0 0
    %504 = vmatprep.subr.bf16.mxu0 0
    %505 = vmatpush1.bf16.msra.mxu0 0
    %506 = vmatprep.subr.bf16.mxu0 0
    %507 = vmatpush1.bf16.msra.mxu0 0
    %508 = vmatprep.subr.bf16.mxu0 0
    %509 = vmatpush1.bf16.msra.mxu0 %v480
    %510 = vmatprep.subr.bf16.mxu0 0
    %511 = vmatpush1.bf16.msra.mxu0 %v479
    %512 = vmatprep.subr.bf16.mxu0 0
    %513 = vmatpush2.bf16.msra.mxu0 0
    %514 = vmatprep.subr.bf16.mxu0 0
    %515 = vmatpush2.bf16.msra.mxu0 0
    %516 = vmatprep.subr.bf16.mxu0 0
    %517 = vmatpush2.bf16.msra.mxu0 0
    %518 = vmatprep.subr.bf16.mxu0 0
    %519 = vmatpush2.bf16.msra.mxu0 0
    %520 = vmatprep.subr.bf16.mxu0 0
    %521 = vmatpush2.bf16.msra.mxu0 0
    %522 = vmatprep.subr.bf16.mxu0 0
    %523 = vmatpush2.bf16.msra.mxu0 0
    %524 = vmatprep.subr.bf16.mxu0 0
    %525 = vmatpush2.bf16.msra.mxu0 0
    %526 = vmatprep.subr.bf16.mxu0 0
    %527 = vmatpush2.bf16.msra.mxu0 0
    %528 = vmatprep.mubr.bf16.mxu0 0
    %529 = vmatmul.mubr.bf16.gmra.mxu0 %v485
    %v530 = vpop.f32.mrf.mxu0
    %v531 = vadd.f32 %v470, %v530
    %v532 = vpop.f32.mrf.mxu0
    %v533 = vpop.f32.mrf.mxu0
    %v534 = vadd.f32 %v470, %v533
    %v535 = vpop.f32.mrf.mxu0
    %536 = vmatprep.mubr.bf16.mxu0 0
    %537 = vmatmul.mubr.bf16.gmra.mxu0 %v488
    %v538 = vpop.f32.mrf.mxu0
    %v539 = vadd.f32 %v470, %v538
    %v540 = vpop.f32.mrf.mxu0
    %v541 = vpop.f32.mrf.mxu0
    %v542 = vadd.f32 %v470, %v541
    %v543 = vpop.f32.mrf.mxu0
    %544 = vmatprep.mubr.bf16.mxu0 0
    %545 = vmatmul.mubr.bf16.gmra.mxu0 %v491
    %v546 = vpop.f32.mrf.mxu0
    %v547 = vadd.f32 %v470, %v546
    %v548 = vpop.f32.mrf.mxu0
    %v549 = vpop.f32.mrf.mxu0
    %v550 = vadd.f32 %v470, %v549
    %v551 = vpop.f32.mrf.mxu0
    %552 = vmatprep.mubr.bf16.mxu0 0
    %553 = vmatmul.mubr.bf16.gmra.mxu0 %v494
    %v554 = vpop.f32.mrf.mxu0
    %v555 = vadd.f32 %v470, %v554
    %v556 = vpop.f32.mrf.mxu0
    %v557 = vpop.f32.mrf.mxu0
    %v558 = vadd.f32 %v470, %v557
    %v559 = vpop.f32.mrf.mxu0
    %560 = vdwg.mxu0
    %v561 = vpack.c.bf16 %v534, %v531
    %v562 = vpack.c.bf16 %v542, %v539
    %v563 = vpack.c.bf16 %v550, %v547
    %v564 = vpack.c.bf16 %v558, %v555
    %v565 = vld [vmem:[%s5] sm:$0xf]
    %v566 = vld [vmem:[%s5 + $0x4] sm:$0xf]
    %v567 = vld [vmem:[%s5 + $0x8] sm:$0xf]
    %v568 = vld [vmem:[%s5 + $0xc] sm:$0xf]
    %v569 = vld [vmem:[%s5 + $0x10] sm:$0xf]
    %v570 = vld [vmem:[%s5 + $0x14] sm:$0xf]
    %v571 = vld [vmem:[%s5 + $0x18] sm:$0xf]
    %v572 = vld [vmem:[%s5 + $0x1c] sm:$0xf]
    %v573 = vld [vmem:[%s5 + $0x20] sm:$0xf]
    %v574 = vld [vmem:[%s5 + $0x24] sm:$0xf]
    %v575 = vld [vmem:[%s5 + $0x28] sm:$0xf]
    %v576 = vld [vmem:[%s5 + $0x2c] sm:$0xf]
    %v577 = vld [vmem:[%s5 + $0x30] sm:$0xf]
    %v578 = vld [vmem:[%s5 + $0x34] sm:$0xf]
    %v579 = vld [vmem:[%s5 + $0x38] sm:$0xf]
    %v580 = vld [vmem:[%s5 + $0x3c] sm:$0xf]
    %v581 = vld [vmem:[%s9 + $0x4] sm:$0x1]
    %v582 = vlaneseq
    %v583 = vshrl.u32 %v582, 7
    %v584 = vsub.s32 0, %v583
    %v585 = vrot.slane %v581, %v584
    %v602 = vunpack.c.l.b16 %v565
    %v603 = vunpack.c.l.b16 %v566
    %v604 = vunpack.c.l.b16 %v567
    %v605 = vunpack.c.l.b16 %v568
    %v606 = vunpack.c.l.b16 %v569
    %v607 = vunpack.c.l.b16 %v570
    %v608 = vunpack.c.l.b16 %v571
    %v609 = vunpack.c.l.b16 %v572
    %v610 = vunpack.c.l.b16 %v573
    %v611 = vunpack.c.l.b16 %v574
    %v612 = vunpack.c.l.b16 %v575
    %v613 = vunpack.c.l.b16 %v576
    %v614 = vunpack.c.l.b16 %v577
    %v615 = vunpack.c.l.b16 %v578
    %v616 = vunpack.c.l.b16 %v579
    %v617 = vunpack.c.l.b16 %v580
    %v618 = vpack.c.b16 %v603, %v602
    %v619 = vpack.c.b16 %v605, %v604
    %v620 = vpack.c.b16 %v607, %v606
    %v621 = vpack.c.b16 %v609, %v608
    %v622 = vpack.c.b16 %v611, %v610
    %v623 = vpack.c.b16 %v613, %v612
    %v624 = vpack.c.b16 %v615, %v614
    %v625 = vpack.c.b16 %v617, %v616
    %634 = vmatprep.subr.bf16.mxu0 0
    %635 = vmatpush1.bf16.msra.mxu0 %v625
    %636 = vmatprep.subr.bf16.mxu0 0
    %637 = vmatpush1.bf16.msra.mxu0 %v624
    %638 = vmatprep.subr.bf16.mxu0 0
    %639 = vmatpush1.bf16.msra.mxu0 %v623
    %640 = vmatprep.subr.bf16.mxu0 0
    %641 = vmatpush1.bf16.msra.mxu0 %v622
    %642 = vmatprep.subr.bf16.mxu0 0
    %643 = vmatpush1.bf16.msra.mxu0 %v621
    %644 = vmatprep.subr.bf16.mxu0 0
    %645 = vmatpush1.bf16.msra.mxu0 %v620
    %646 = vmatprep.subr.bf16.mxu0 0
    %647 = vmatpush1.bf16.msra.mxu0 %v619
    %648 = vmatprep.subr.bf16.mxu0 0
    %649 = vmatpush1.bf16.msra.mxu0 %v618
    %650 = vmatprep.subr.bf16.mxu0 0
    %651 = vmatpush2.bf16.msra.mxu0 0
    %652 = vmatprep.subr.bf16.mxu0 0
    %653 = vmatpush2.bf16.msra.mxu0 0
    %654 = vmatprep.subr.bf16.mxu0 0
    %655 = vmatpush2.bf16.msra.mxu0 0
    %656 = vmatprep.subr.bf16.mxu0 0
    %657 = vmatpush2.bf16.msra.mxu0 0
    %658 = vmatprep.subr.bf16.mxu0 0
    %659 = vmatpush2.bf16.msra.mxu0 0
    %660 = vmatprep.subr.bf16.mxu0 0
    %661 = vmatpush2.bf16.msra.mxu0 0
    %662 = vmatprep.subr.bf16.mxu0 0
    %663 = vmatpush2.bf16.msra.mxu0 0
    %664 = vmatprep.subr.bf16.mxu0 0
    %665 = vmatpush2.bf16.msra.mxu0 0
    %666 = vmatprep.mubr.bf16.mxu0 0
    %667 = vmatmul.mubr.bf16.gmra.mxu0 %v561
    %v668 = vpop.f32.mrf.mxu0
    %v669 = vadd.f32 %v585, %v668
    %v670 = vpop.f32.mrf.mxu0
    %v671 = vpop.f32.mrf.mxu0
    %v672 = vadd.f32 %v585, %v671
    %v673 = vpop.f32.mrf.mxu0
    %674 = vmatprep.mubr.bf16.mxu0 0
    %675 = vmatmul.mubr.bf16.gmra.mxu0 %v562
    %v676 = vpop.f32.mrf.mxu0
    %v677 = vadd.f32 %v585, %v676
    %v678 = vpop.f32.mrf.mxu0
    %v679 = vpop.f32.mrf.mxu0
    %v680 = vadd.f32 %v585, %v679
    %v681 = vpop.f32.mrf.mxu0
    %682 = vmatprep.mubr.bf16.mxu0 0
    %683 = vmatmul.mubr.bf16.gmra.mxu0 %v563
    %v684 = vpop.f32.mrf.mxu0
    %v685 = vadd.f32 %v585, %v684
    %v686 = vpop.f32.mrf.mxu0
    %v687 = vpop.f32.mrf.mxu0
    %v688 = vadd.f32 %v585, %v687
    %v689 = vpop.f32.mrf.mxu0
    %690 = vmatprep.mubr.bf16.mxu0 0
    %691 = vmatmul.mubr.bf16.gmra.mxu0 %v564
    %v692 = vpop.f32.mrf.mxu0
    %v693 = vadd.f32 %v585, %v692
    %v694 = vpop.f32.mrf.mxu0
    %v695 = vpop.f32.mrf.mxu0
    %v696 = vadd.f32 %v585, %v695
    %v697 = vpop.f32.mrf.mxu0
    %698 = vdwg.mxu0
    %v699 = vmax.f32 %v669, 0.0
    %v700 = vmax.f32 %v672, 0.0
    %v701 = vmax.f32 %v677, 0.0
    %v702 = vmax.f32 %v680, 0.0
    %v703 = vmax.f32 %v685, 0.0
    %v704 = vmax.f32 %v688, 0.0
    %v705 = vmax.f32 %v693, 0.0
    %v706 = vmax.f32 %v696, 0.0
    %v707 = vpack.c.bf16 %v700, %v699
    %v708 = vpack.c.bf16 %v702, %v701
    %v709 = vpack.c.bf16 %v704, %v703
    %v710 = vpack.c.bf16 %v706, %v705
    %v711 = vadd.bf16 %v707, %v458
    %v712 = vadd.bf16 %v708, %v459
    %v713 = vadd.bf16 %v709, %v460
    %v714 = vadd.bf16 %v710, %v461
    %v715 = vld [vmem:[#allocation2] sm:$0xf]
    %v716 = vld [vmem:[#allocation2 + $0x4] sm:$0xf]
    %v717 = vld [vmem:[#allocation2 + $0x8] sm:$0xf]
    %v718 = vld [vmem:[#allocation2 + $0xc] sm:$0xf]
    %v719 = vld [vmem:[%s9 + $0x5] sm:$0x1]
    %v720 = vlaneseq
    %v721 = vshrl.u32 %v720, 7
    %v722 = vsub.s32 0, %v721
    %v723 = vrot.slane %v719, %v722
    %v728 = vunpack.c.l.b16 %v715
    %v729 = vunpack.c.l.b16 %v716
    %v730 = vunpack.c.l.b16 %v717
    %v731 = vunpack.c.l.b16 %v718
    %v732 = vpack.c.b16 %v729, %v728
    %v733 = vpack.c.b16 %v731, %v730
    %v737 = vsel %vm483, %v711, 0
    %v740 = vsel %vm483, %v712, 0
    %v743 = vsel %vm483, %v713, 0
    %v746 = vsel %vm483, %v714, 0
    %748 = vmatprep.subr.bf16.mxu0 0
    %749 = vmatpush1.bf16.msra.mxu0 0
    %750 = vmatprep.subr.bf16.mxu0 0
    %751 = vmatpush1.bf16.msra.mxu0 0
    %752 = vmatprep.subr.bf16.mxu0 0
    %753 = vmatpush1.bf16.msra.mxu0 0
    %754 = vmatprep.subr.bf16.mxu0 0
    %755 = vmatpush1.bf16.msra.mxu0 0
    %756 = vmatprep.subr.bf16.mxu0 0
    %757 = vmatpush1.bf16.msra.mxu0 0
    %758 = vmatprep.subr.bf16.mxu0 0
    %759 = vmatpush1.bf16.msra.mxu0 0
    %760 = vmatprep.subr.bf16.mxu0 0
    %761 = vmatpush1.bf16.msra.mxu0 %v733
    %762 = vmatprep.subr.bf16.mxu0 0
    %763 = vmatpush1.bf16.msra.mxu0 %v732
    %764 = vmatprep.subr.bf16.mxu0 0
    %765 = vmatpush2.bf16.msra.mxu0 0
    %766 = vmatprep.subr.bf16.mxu0 0
    %767 = vmatpush2.bf16.msra.mxu0 0
    %768 = vmatprep.subr.bf16.mxu0 0
    %769 = vmatpush2.bf16.msra.mxu0 0
    %770 = vmatprep.subr.bf16.mxu0 0
    %771 = vmatpush2.bf16.msra.mxu0 0
    %772 = vmatprep.subr.bf16.mxu0 0
    %773 = vmatpush2.bf16.msra.mxu0 0
    %774 = vmatprep.subr.bf16.mxu0 0
    %775 = vmatpush2.bf16.msra.mxu0 0
    %776 = vmatprep.subr.bf16.mxu0 0
    %777 = vmatpush2.bf16.msra.mxu0 0
    %778 = vmatprep.subr.bf16.mxu0 0
    %779 = vmatpush2.bf16.msra.mxu0 0
    %780 = vmatprep.mubr.bf16.mxu0 0
    %781 = vmatmul.mubr.bf16.gmra.mxu0 %v737
    %v782 = vpop.f32.mrf.mxu0
    %v783 = vadd.f32 %v723, %v782
    %v784 = vpop.f32.mrf.mxu0
    %v785 = vpop.f32.mrf.mxu0
    %v786 = vadd.f32 %v723, %v785
    %v787 = vpop.f32.mrf.mxu0
    %788 = vmatprep.mubr.bf16.mxu0 0
    %789 = vmatmul.mubr.bf16.gmra.mxu0 %v740
    %v790 = vpop.f32.mrf.mxu0
    %v791 = vadd.f32 %v723, %v790
    %v792 = vpop.f32.mrf.mxu0
    %v793 = vpop.f32.mrf.mxu0
    %v794 = vadd.f32 %v723, %v793
    %v795 = vpop.f32.mrf.mxu0
    %796 = vmatprep.mubr.bf16.mxu0 0
    %797 = vmatmul.mubr.bf16.gmra.mxu0 %v743
    %v798 = vpop.f32.mrf.mxu0
    %v799 = vadd.f32 %v723, %v798
    %v800 = vpop.f32.mrf.mxu0
    %v801 = vpop.f32.mrf.mxu0
    %v802 = vadd.f32 %v723, %v801
    %v803 = vpop.f32.mrf.mxu0
    %804 = vmatprep.mubr.bf16.mxu0 0
    %805 = vmatmul.mubr.bf16.gmra.mxu0 %v746
    %v806 = vpop.f32.mrf.mxu0
    %v807 = vadd.f32 %v723, %v806
    %v808 = vpop.f32.mrf.mxu0
    %v809 = vpop.f32.mrf.mxu0
    %v810 = vadd.f32 %v723, %v809
    %v811 = vpop.f32.mrf.mxu0
    %812 = vdwg.mxu0
    %v813 = vmax.f32 %v783, 0.0
    %v814 = vmax.f32 %v786, 0.0
    %v815 = vmax.f32 %v791, 0.0
    %v816 = vmax.f32 %v794, 0.0
    %v817 = vmax.f32 %v799, 0.0
    %v818 = vmax.f32 %v802, 0.0
    %v819 = vmax.f32 %v807, 0.0
    %v820 = vmax.f32 %v810, 0.0
    %v821 = vpack.c.bf16 %v814, %v813
    %v822 = vpack.c.bf16 %v816, %v815
    %v823 = vpack.c.bf16 %v818, %v817
    %v824 = vpack.c.bf16 %v820, %v819
    %v825 = vadd.bf16 %v821, %v332
    %v826 = vadd.bf16 %v822, %v333
    %v827 = vadd.bf16 %v823, %v334
    %v828 = vadd.bf16 %v824, %v335
    %v829 = vld [vmem:[%s7] sm:$0xf]
    %v830 = vld [vmem:[%s7 + $0x4] sm:$0xf]
    %v831 = vld [vmem:[%s7 + $0x8] sm:$0xf]
    %v832 = vld [vmem:[%s7 + $0xc] sm:$0xf]
    %v833 = vld [vmem:[%s7 + $0x10] sm:$0xf]
    %v834 = vld [vmem:[%s7 + $0x14] sm:$0xf]
    %v835 = vld [vmem:[%s7 + $0x18] sm:$0xf]
    %v836 = vld [vmem:[%s7 + $0x1c] sm:$0xf]
    %v837 = vld [vmem:[%s9 + $0x6] sm:$0x1]
    %v838 = vlaneseq
    %v839 = vshrl.u32 %v838, 7
    %v840 = vsub.s32 0, %v839
    %v841 = vrot.slane %v837, %v840
    %v850 = vunpack.c.l.b16 %v829
    %v851 = vunpack.c.l.b16 %v830
    %v852 = vunpack.c.l.b16 %v831
    %v853 = vunpack.c.l.b16 %v832
    %v854 = vunpack.c.l.b16 %v833
    %v855 = vunpack.c.l.b16 %v834
    %v856 = vunpack.c.l.b16 %v835
    %v857 = vunpack.c.l.b16 %v836
    %v858 = vpack.c.b16 %v851, %v850
    %v859 = vpack.c.b16 %v853, %v852
    %v860 = vpack.c.b16 %v855, %v854
    %v861 = vpack.c.b16 %v857, %v856
    %v867 = vsel %vm246, %v825, 0
    %v870 = vsel %vm246, %v826, 0
    %v873 = vsel %vm246, %v827, 0
    %v876 = vsel %vm246, %v828, 0
    %878 = vmatprep.subr.bf16.mxu0 0
    %879 = vmatpush1.bf16.msra.mxu0 0
    %880 = vmatprep.subr.bf16.mxu0 0
    %881 = vmatpush1.bf16.msra.mxu0 0
    %882 = vmatprep.subr.bf16.mxu0 0
    %883 = vmatpush1.bf16.msra.mxu0 0
    %884 = vmatprep.subr.bf16.mxu0 0
    %885 = vmatpush1.bf16.msra.mxu0 0
    %886 = vmatprep.subr.bf16.mxu0 0
    %887 = vmatpush1.bf16.msra.mxu0 %v861
    %888 = vmatprep.subr.bf16.mxu0 0
    %889 = vmatpush1.bf16.msra.mxu0 %v860
    %890 = vmatprep.subr.bf16.mxu0 0
    %891 = vmatpush1.bf16.msra.mxu0 %v859
    %892 = vmatprep.subr.bf16.mxu0 0
    %893 = vmatpush1.bf16.msra.mxu0 %v858
    %894 = vmatprep.subr.bf16.mxu0 0
    %895 = vmatpush2.bf16.msra.mxu0 0
    %896 = vmatprep.subr.bf16.mxu0 0
    %897 = vmatpush2.bf16.msra.mxu0 0
    %898 = vmatprep.subr.bf16.mxu0 0
    %899 = vmatpush2.bf16.msra.mxu0 0
    %900 = vmatprep.subr.bf16.mxu0 0
    %901 = vmatpush2.bf16.msra.mxu0 0
    %902 = vmatprep.subr.bf16.mxu0 0
    %903 = vmatpush2.bf16.msra.mxu0 0
    %904 = vmatprep.subr.bf16.mxu0 0
    %905 = vmatpush2.bf16.msra.mxu0 0
    %906 = vmatprep.subr.bf16.mxu0 0
    %907 = vmatpush2.bf16.msra.mxu0 0
    %908 = vmatprep.subr.bf16.mxu0 0
    %909 = vmatpush2.bf16.msra.mxu0 0
    %910 = vmatprep.mubr.bf16.mxu0 0
    %911 = vmatmul.mubr.bf16.gmra.mxu0 %v867
    %v912 = vpop.f32.mrf.mxu0
    %v913 = vadd.f32 %v841, %v912
    %v914 = vpop.f32.mrf.mxu0
    %v915 = vpop.f32.mrf.mxu0
    %v916 = vadd.f32 %v841, %v915
    %v917 = vpop.f32.mrf.mxu0
    %918 = vmatprep.mubr.bf16.mxu0 0
    %919 = vmatmul.mubr.bf16.gmra.mxu0 %v870
    %v920 = vpop.f32.mrf.mxu0
    %v921 = vadd.f32 %v841, %v920
    %v922 = vpop.f32.mrf.mxu0
    %v923 = vpop.f32.mrf.mxu0
    %v924 = vadd.f32 %v841, %v923
    %v925 = vpop.f32.mrf.mxu0
    %926 = vmatprep.mubr.bf16.mxu0 0
    %927 = vmatmul.mubr.bf16.gmra.mxu0 %v873
    %v928 = vpop.f32.mrf.mxu0
    %v929 = vadd.f32 %v841, %v928
    %v930 = vpop.f32.mrf.mxu0
    %v931 = vpop.f32.mrf.mxu0
    %v932 = vadd.f32 %v841, %v931
    %v933 = vpop.f32.mrf.mxu0
    %934 = vmatprep.mubr.bf16.mxu0 0
    %935 = vmatmul.mubr.bf16.gmra.mxu0 %v876
    %v936 = vpop.f32.mrf.mxu0
    %v937 = vadd.f32 %v841, %v936
    %v938 = vpop.f32.mrf.mxu0
    %v939 = vpop.f32.mrf.mxu0
    %v940 = vadd.f32 %v841, %v939
    %v941 = vpop.f32.mrf.mxu0
    %942 = vdwg.mxu0
    %v943 = vmax.f32 %v913, 0.0
    %v944 = vmax.f32 %v916, 0.0
    %v945 = vmax.f32 %v921, 0.0
    %v946 = vmax.f32 %v924, 0.0
    %v947 = vmax.f32 %v929, 0.0
    %v948 = vmax.f32 %v932, 0.0
    %v949 = vmax.f32 %v937, 0.0
    %v950 = vmax.f32 %v940, 0.0
    %v951 = vpack.c.bf16 %v944, %v943
    %v952 = vpack.c.bf16 %v946, %v945
    %v953 = vpack.c.bf16 %v948, %v947
    %v954 = vpack.c.bf16 %v950, %v949
    %v955 = vadd.bf16 %v951, %v205
    %v956 = vadd.bf16 %v952, %v206
    %v957 = vadd.bf16 %v953, %v207
    %v958 = vadd.bf16 %v954, %v208
    %v959 = vld [vmem:[%s8] sm:$0xf]
    %v960 = vld [vmem:[%s8 + $0x4] sm:$0xf]
    %v961 = vld [vmem:[%s8 + $0x8] sm:$0xf]
    %v962 = vld [vmem:[%s8 + $0xc] sm:$0xf]
    %v963 = vld [vmem:[%s8 + $0x10] sm:$0xf]
    %v964 = vld [vmem:[%s8 + $0x14] sm:$0xf]
    %v965 = vld [vmem:[%s8 + $0x18] sm:$0xf]
    %v966 = vld [vmem:[%s8 + $0x1c] sm:$0xf]
    %v967 = vld [vmem:[%s9 + $0x7] sm:$0x1]
    %v968 = vlaneseq
    %v969 = vshrl.u32 %v968, 7
    %v970 = vsub.s32 0, %v969
    %v971 = vrot.slane %v967, %v970
    %v980 = vunpack.c.l.b16 %v959
    %v981 = vunpack.c.l.b16 %v960
    %v982 = vunpack.c.l.b16 %v961
    %v983 = vunpack.c.l.b16 %v962
    %v984 = vunpack.c.l.b16 %v963
    %v985 = vunpack.c.l.b16 %v964
    %v986 = vunpack.c.l.b16 %v965
    %v987 = vunpack.c.l.b16 %v966
    %v988 = vpack.c.b16 %v981, %v980
    %v989 = vpack.c.b16 %v983, %v982
    %v990 = vpack.c.b16 %v985, %v984
    %v991 = vpack.c.b16 %v987, %v986
    %v997 = vsel %vm246, %v955, 0
    %v1000 = vsel %vm246, %v956, 0
    %v1003 = vsel %vm246, %v957, 0
    %v1006 = vsel %vm246, %v958, 0
    %1008 = vmatprep.subr.bf16.mxu0 0
    %1009 = vmatpush1.bf16.msra.mxu0 0
    %1010 = vmatprep.subr.bf16.mxu0 0
    %1011 = vmatpush1.bf16.msra.mxu0 0
    %1012 = vmatprep.subr.bf16.mxu0 0
    %1013 = vmatpush1.bf16.msra.mxu0 0
    %1014 = vmatprep.subr.bf16.mxu0 0
    %1015 = vmatpush1.bf16.msra.mxu0 0
    %1016 = vmatprep.subr.bf16.mxu0 0
    %1017 = vmatpush1.bf16.msra.mxu0 %v991
    %1018 = vmatprep.subr.bf16.mxu0 0
    %1019 = vmatpush1.bf16.msra.mxu0 %v990
    %1020 = vmatprep.subr.bf16.mxu0 0
    %1021 = vmatpush1.bf16.msra.mxu0 %v989
    %1022 = vmatprep.subr.bf16.mxu0 0
    %1023 = vmatpush1.bf16.msra.mxu0 %v988
    %1024 = vmatprep.subr.bf16.mxu0 0
    %1025 = vmatpush2.bf16.msra.mxu0 0
    %1026 = vmatprep.subr.bf16.mxu0 0
    %1027 = vmatpush2.bf16.msra.mxu0 0
    %1028 = vmatprep.subr.bf16.mxu0 0
    %1029 = vmatpush2.bf16.msra.mxu0 0
    %1030 = vmatprep.subr.bf16.mxu0 0
    %1031 = vmatpush2.bf16.msra.mxu0 0
    %1032 = vmatprep.subr.bf16.mxu0 0
    %1033 = vmatpush2.bf16.msra.mxu0 0
    %1034 = vmatprep.subr.bf16.mxu0 0
    %1035 = vmatpush2.bf16.msra.mxu0 0
    %1036 = vmatprep.subr.bf16.mxu0 0
    %1037 = vmatpush2.bf16.msra.mxu0 0
    %1038 = vmatprep.subr.bf16.mxu0 0
    %1039 = vmatpush2.bf16.msra.mxu0 0
    %1040 = vmatprep.mubr.bf16.mxu0 0
    %1041 = vmatmul.mubr.bf16.gmra.mxu0 %v997
    %v1042 = vpop.f32.mrf.mxu0
    %v1043 = vadd.f32 %v971, %v1042
    %v1044 = vpop.f32.mrf.mxu0
    %v1045 = vpop.f32.mrf.mxu0
    %v1046 = vadd.f32 %v971, %v1045
    %v1047 = vpop.f32.mrf.mxu0
    %1048 = vmatprep.mubr.bf16.mxu0 0
    %1049 = vmatmul.mubr.bf16.gmra.mxu0 %v1000
    %v1050 = vpop.f32.mrf.mxu0
    %v1051 = vadd.f32 %v971, %v1050
    %v1052 = vpop.f32.mrf.mxu0
    %v1053 = vpop.f32.mrf.mxu0
    %v1054 = vadd.f32 %v971, %v1053
    %v1055 = vpop.f32.mrf.mxu0
    %1056 = vmatprep.mubr.bf16.mxu0 0
    %1057 = vmatmul.mubr.bf16.gmra.mxu0 %v1003
    %v1058 = vpop.f32.mrf.mxu0
    %v1059 = vadd.f32 %v971, %v1058
    %v1060 = vpop.f32.mrf.mxu0
    %v1061 = vpop.f32.mrf.mxu0
    %v1062 = vadd.f32 %v971, %v1061
    %v1063 = vpop.f32.mrf.mxu0
    %1064 = vmatprep.mubr.bf16.mxu0 0
    %1065 = vmatmul.mubr.bf16.gmra.mxu0 %v1006
    %v1066 = vpop.f32.mrf.mxu0
    %v1067 = vadd.f32 %v971, %v1066
    %v1068 = vpop.f32.mrf.mxu0
    %v1069 = vpop.f32.mrf.mxu0
    %v1070 = vadd.f32 %v971, %v1069
    %v1071 = vpop.f32.mrf.mxu0
    %1072 = vdwg.mxu0
    %1073 = vst [vmem:[#allocation5] sm:$0xff] %v1043
    %1074 = vst [vmem:[#allocation5 + $0x8] sm:$0xff] %v1046
    %1075 = vst [vmem:[#allocation5 + $0x10] sm:$0xff] %v1051
    %1076 = vst [vmem:[#allocation5 + $0x18] sm:$0xff] %v1054
    %1077 = vst [vmem:[#allocation5 + $0x20] sm:$0xff] %v1059
    %1078 = vst [vmem:[#allocation5 + $0x28] sm:$0xff] %v1062
    %1079 = vst [vmem:[#allocation5 + $0x30] sm:$0xff] %v1067
    %1080 = vst [vmem:[#allocation5 + $0x38] sm:$0xff] %v1070
    // Predicated region
    $region46: #{tpu_custom_call.1} parent=1 // pred_check
      _
    $region47: #{tpu_custom_call.1} parent=1 // pred_check_branch
      %1082 = sbr.rel (0) target = $region49
    $region48: #{tpu_custom_call.1} parent=1 // pred_region
      %s1084 = ssub.s32 1024, 1024
      %1085 = vsyncadd [#allocation4], %s1084
      %s1086 = sshll.u32 [#allocation5], 4
      %s1087 = int_to_ptr.vmem [resolvable:$true] %s1086
      %1092 = dma.vmem_to_hbm [thread:$0]  %s1087, 1024, %s10, [#allocation4], 128, 128, 8
    $region49: #{tpu_custom_call.1} parent=1 // pred_fallthru
      _
    // Predicated region
    $region50: #{tpu_custom_call.1} parent=1 // pred_check
      _
    $region51: #{tpu_custom_call.1} parent=1 // pred_check_branch
      %1094 = sbr.rel (0) target = $region53
    $region52: #{tpu_custom_call.1} parent=1 // pred_region
      %1095 = dma.done [#allocation4], 1024
    $region53: #{tpu_custom_call.1} parent=1 // pred_fallthru
      _
    %1096 = vsyncpa [#allocation3], 1
    %1097 = vsyncpa [#allocation4], 1

</llo_original>
